<compile_context>
chip_gen: v7x
topology: tpu7x:2x2x1
jax: 0.10.0
libtpu: 0.0.40
codegen_flags: <defaults>
</compile_context>

<pallas_src>
import functools
from typing import NamedTuple

import jax
import jax.numpy as jnp
from jax.experimental import pallas as pl
from jax.experimental.pallas import tpu as pltpu

NEG_INF = -1e30  # bias for padded vocab columns (exp underflows to 0, no NaNs)


def _round_up(x, m):
    return (x + m - 1) // m * m


def _vmem_limit(*buf_bytes):
    """Scoped-VMEM limit covering the listed buffers with margin, v7x-safe."""
    need = sum(buf_bytes)
    return int(min(64 << 20, max(need * 5 // 4, 16 << 20)))


class GeneratorWeights(NamedTuple):
    """One-time prepared projection weights (do NOT rebuild per forward)."""
    w_bf: jax.Array   # (d_model, V_pad) bfloat16, vocab padded with zeros
    b2d: jax.Array    # (1, V_pad) float32, padded columns = NEG_INF
    vocab: int        # true vocab size
    tn: int           # vocab tile (multiple of 128, divides V_pad)


def prepare_generator_weights(w, b, *, tn=2048):
    """Hoisted weight prep: bf16 cast + vocab padding, done once per model."""
    d_model, vocab = w.shape
    tn = max(128, min(_round_up(tn, 128), _round_up(vocab, 128)))
    V_pad = _round_up(vocab, tn)
    w_bf = w.astype(jnp.bfloat16)
    b_f32 = b.astype(jnp.float32)
    if V_pad != vocab:
        w_bf = jnp.pad(w_bf, ((0, 0), (0, V_pad - vocab)))
        b_f32 = jnp.pad(b_f32, (0, V_pad - vocab), constant_values=NEG_INF)
    return GeneratorWeights(w_bf=w_bf, b2d=b_f32.reshape(1, V_pad),
                            vocab=vocab, tn=tn)


# ---------------------------------------------------------------------------
# Pass 1: per-row logsumexp of (x @ W + b), online over vocab tiles.
# Grid = (rows, vocab): rows outer ("parallel"), vocab inner ("arbitrary",
# required by the running-max/sum accumulator).
# ---------------------------------------------------------------------------
def _lse_kernel(x_ref, w_ref, b_ref, lse_ref, m_sc, l_sc, *, tn):
    j = pl.program_id(1)

    @pl.when(j == 0)
    def _():
        m_sc[...] = jnp.full_like(m_sc, -jnp.inf)
        l_sc[...] = jnp.zeros_like(l_sc)

    # Bias is a single full-width VMEM block; take the aligned lane slice.
    b_tile = b_ref[:, pl.ds(pl.multiple_of(j * tn, 128), tn)]

    # bf16 x/W tiles, f32 accumulation on the MXU; bias + softmax math in f32.
    logits = jnp.dot(x_ref[...], w_ref[...],
                     preferred_element_type=jnp.float32) + b_tile

    m_prev = m_sc[...]
    m_new = jnp.maximum(m_prev, jnp.max(logits, axis=-1, keepdims=True))
    l_sc[...] = (l_sc[...] * jnp.exp(m_prev - m_new)
                 + jnp.sum(jnp.exp(logits - m_new), axis=-1, keepdims=True))
    m_sc[...] = m_new

    @pl.when(j == pl.num_programs(1) - 1)
    def _():
        lse_ref[...] = m_sc[...] + jnp.log(l_sc[...])


# ---------------------------------------------------------------------------
# Pass 2: out = (x @ W + b) - lse.  Grid = (vocab, rows): vocab OUTER so the
# W tile's block index is constant across the inner row loop (W DMA'd once per
# pass); x / lse are re-streamed instead (much smaller).
# ---------------------------------------------------------------------------
def _out_kernel(x_ref, w_ref, b_ref, lse_ref, o_ref, *, tn):
    j = pl.program_id(0)  # vocab tile index (outer grid axis)
    b_tile = b_ref[:, pl.ds(pl.multiple_of(j * tn, 128), tn)]
    logits = jnp.dot(x_ref[...], w_ref[...],
                     preferred_element_type=jnp.float32) + b_tile
    o_ref[...] = (logits - lse_ref[...]).astype(o_ref.dtype)


def generator_forward(x, weights: GeneratorWeights, *, tm=512, out_dtype=None):
    """x: (batch, seq, d_model); weights: prepare_generator_weights(w, b).

    Returns log_softmax(x @ w + b, axis=-1) with shape (batch, seq, vocab).
    Pass out_dtype=jnp.bfloat16 to halve the dominant (M, vocab) HBM write.
    """
    batch, seq, d_model = x.shape
    w_bf, b2d, vocab, tn = weights
    assert w_bf.shape[0] == d_model, "weight/input d_model mismatch"
    V_pad = w_bf.shape[1]
    nv = V_pad // tn
    out_dtype = x.dtype if out_dtype is None else out_dtype
    out_itemsize = jnp.dtype(out_dtype).itemsize

    # ---- Row tiling: clamp to problem size; guarantee >= 2 row tiles so the
    # "parallel" row axis can use both v7x TensorCores whenever M allows.
    M = batch * seq
    M_r = _round_up(M, 8)
    tm = max(8, min(_round_up(tm, 8), M_r))
    if M_r >= 16 and 2 * tm > M_r:
        tm = _round_up((M_r + 1) // 2, 8)
    M_pad = _round_up(M, tm)
    nm = M_pad // tm

    # Only x is cast/padded per call (weights are prepared once).
    x2d = x.reshape(M, d_model).astype(jnp.bfloat16)
    if M_pad != M:
        x2d = jnp.pad(x2d, ((0, M_pad - M), (0, 0)))

    x_bytes = M_pad * d_model * 2
    w_bytes = d_model * V_pad * 2
    b_bytes = V_pad * 4
    lse_bytes = M_pad * 4
    out_bytes = M_pad * V_pad * out_itemsize
    flops = 2 * M_pad * d_model * V_pad

    lse_kernel = functools.partial(_lse_kernel, tn=tn)
    out_kernel = functools.partial(_out_kernel, tn=tn)

    # ---- Pass 1: per-row logsumexp (tiny (M, 1) output) --------------------
    p1_vmem = _vmem_limit(
        2 * tm * d_model * 2,      # x tile, double-buffered (bf16)
        2 * d_model * tn * 2,      # W tile
        2 * V_pad * 4,             # full-width bias block
        2 * tm * 4,                # lse output tile
        2 * tm * 4,                # m/l scratches
    )
    lse = pl.pallas_call(
        lse_kernel,
        out_shape=jax.ShapeDtypeStruct((M_pad, 1), jnp.float32),
        grid_spec=pltpu.PrefetchScalarGridSpec(
            num_scalar_prefetch=0,
            grid=(nm, nv),
            in_specs=[
                pl.BlockSpec((tm, d_model), lambda i, j: (i, 0)),   # x rows
                pl.BlockSpec((d_model, tn), lambda i, j: (0, j)),   # W cols
                pl.BlockSpec((1, V_pad), lambda i, j: (0, 0)),      # bias (once)
            ],
            out_specs=pl.BlockSpec((tm, 1), lambda i, j: (i, 0)),
            scratch_shapes=[pltpu.VMEM((tm, 1), jnp.float32),   # running max
                            pltpu.VMEM((tm, 1), jnp.float32)],  # running sumexp
        ),
        compiler_params=pltpu.CompilerParams(
            dimension_semantics=("parallel", "arbitrary"),
            vmem_limit_bytes=p1_vmem),
        cost_estimate=pl.CostEstimate(
            flops=flops,
            transcendentals=M_pad * V_pad + M_pad,
            # W is re-streamed once per row tile in pass 1 (vocab is inner).
            bytes_accessed=x_bytes + nm * w_bytes + b_bytes + lse_bytes),
    )(x2d, w_bf, b2d)

    # ---- Pass 2: write log-probs; W streamed exactly once (vocab outer) ----
    p2_vmem = _vmem_limit(
        2 * tm * d_model * 2,
        2 * d_model * tn * 2,
        2 * V_pad * 4,
        2 * tm * 4,
        2 * tm * tn * out_itemsize,
    )
    out2d = pl.pallas_call(
        out_kernel,
        out_shape=jax.ShapeDtypeStruct((M_pad, V_pad), out_dtype),
        grid_spec=pltpu.PrefetchScalarGridSpec(
            num_scalar_prefetch=0,
            grid=(nv, nm),                                   # vocab OUTER, rows INNER
            in_specs=[
                pl.BlockSpec((tm, d_model), lambda j, i: (i, 0)),   # x (re-streamed)
                pl.BlockSpec((d_model, tn), lambda j, i: (0, j)),   # W (const inner)
                pl.BlockSpec((1, V_pad), lambda j, i: (0, 0)),      # bias (once)
                pl.BlockSpec((tm, 1), lambda j, i: (i, 0)),         # lse rows
            ],
            out_specs=pl.BlockSpec((tm, tn), lambda j, i: (i, j)),
        ),
        compiler_params=pltpu.CompilerParams(
            dimension_semantics=("parallel", "parallel"),
            vmem_limit_bytes=p2_vmem),
        cost_estimate=pl.CostEstimate(
            flops=flops,
            transcendentals=0,
            # x and lse are re-streamed per vocab tile; W read exactly once.
            bytes_accessed=(nv * x_bytes + w_bytes + b_bytes
                            + nv * lse_bytes + out_bytes)),
    )(x2d, w_bf, b2d, lse)

    # TODO(synk): for training, fuse the downstream NLL label-gather into pass 2
    # so the full (M, vocab) log-prob tensor is never written to HBM at all.
    return out2d[:M, :vocab].reshape(batch, seq, vocab)


def reference_forward(x, w, b):
    logits = jnp.einsum("bsd,dv->bsv", x, w) + b
    return jax.nn.log_softmax(logits, axis=-1)


if __name__ == "__main__":
    key = jax.random.PRNGKey(0)

    def run_case(batch, seq, d_model, vocab_size, subkey,
                 out_dtype=None, atol=1e-2, sum_atol=1e-3):
        kx, kw, kb = jax.random.split(subkey, 3)
        x = jax.random.normal(kx, (batch, seq, d_model), dtype=jnp.float32)
        w = jax.random.normal(kw, (d_model, vocab_size), dtype=jnp.float32) * 0.02
        b = jax.random.normal(kb, (vocab_size,), dtype=jnp.float32) * 0.02

        weights = prepare_generator_weights(w, b)          # one-time weight prep
        out = jax.block_until_ready(
            generator_forward(x, weights, out_dtype=out_dtype))
        ref = reference_forward(x, w, b)

        assert out.shape == (batch, seq, vocab_size)
        out_f32 = out.astype(jnp.float32)
        # bf16 matmul inputs (and optionally bf16 output) -> loosened tolerance.
        assert jnp.allclose(out_f32, ref, atol=atol, rtol=atol), \
            f"max abs err {jnp.max(jnp.abs(out_f32 - ref))}"
        # internal consistency: rows of a log_softmax must exp-sum to 1
        assert jnp.allclose(jnp.sum(jnp.exp(out_f32), axis=-1), 1.0, atol=sum_atol)

    k1, k2, k3 = jax.random.split(key, 3)
    # Shapes implied by the module (d_model=32, vocab=128, batch=2, seq=8).
    run_case(batch=2, seq=8, d_model=32, vocab_size=128, subkey=k1)
    # Ragged case exercising the row/vocab padding paths.
    run_case(batch=2, seq=5, d_model=32, vocab_size=96, subkey=k2)
    # bf16 output path (halves the dominant HBM write), looser tolerance.
    run_case(batch=4, seq=8, d_model=32, vocab_size=128, subkey=k3,
             out_dtype=jnp.bfloat16, atol=5e-2, sum_atol=1e-2)

    print("KERNEL_OK")
</pallas_src>

<mosaic_0001>
module attributes {stable_mosaic.version = 11 : i64} {
  func.func @_lse_kernel(%arg0: i32, %arg1: i32, %arg2: memref<8x32xbf16, #tpu.memory_space<vmem>>, %arg3: memref<32x128xbf16, #tpu.memory_space<vmem>>, %arg4: memref<1x128xf32, #tpu.memory_space<vmem>>, %arg5: memref<8x1xf32, #tpu.memory_space<vmem>>, %arg6: memref<8x1xf32, #tpu.memory_space<vmem>>, %arg7: memref<8x1xf32, #tpu.memory_space<vmem>>) attributes {dimension_semantics = [#tpu.dimension_semantics<parallel>, #tpu.dimension_semantics<arbitrary>], iteration_bounds = array<i64: 2, 1>, scalar_prefetch = 0 : i64, scratch_operands = 2 : i64, tpu.core_type = #tpu.core_type<tc>, window_params = [{transform_indices = @transform_0, window_bounds = array<i64: 8, 32>}, {transform_indices = @transform_1, window_bounds = array<i64: 32, 128>}, {pipeline_mode = #tpu.pipeline_mode<synchronous>, transform_indices = @transform_2, window_bounds = array<i64: 1, 128>}, {transform_indices = @transform_3, window_bounds = array<i64: 8, 1>}]} {
    %c0_i32 = arith.constant 0 : i32
    %0 = arith.cmpi eq, %arg1, %c0_i32 : i32
    %1 = arith.extui %0 : i1 to i32
    %c0_i32_0 = arith.constant 0 : i32
    %2 = arith.cmpi ne, %1, %c0_i32_0 : i32
    scf.if %2 {
      %cst_17 = arith.constant 0xFF800000 : f32
      %31 = vector.broadcast %cst_17 : f32 to vector<8x1xf32>
      %c0_18 = arith.constant 0 : index
      %c0_19 = arith.constant 0 : index
      %32 = vector.load %arg6[%c0_18, %c0_19] : memref<8x1xf32, #tpu.memory_space<vmem>>, vector<8x1xf32>
      tpu.vector_store %arg6[%c0_18, %c0_19], %31 {strides = array<i32>} : memref<8x1xf32, #tpu.memory_space<vmem>>, vector<8x1xf32>,
      %cst_20 = arith.constant 0.000000e+00 : f32
      %33 = vector.broadcast %cst_20 : f32 to vector<8x1xf32>
      %c0_21 = arith.constant 0 : index
      %c0_22 = arith.constant 0 : index
      %34 = vector.load %arg7[%c0_21, %c0_22] : memref<8x1xf32, #tpu.memory_space<vmem>>, vector<8x1xf32>
      tpu.vector_store %arg7[%c0_21, %c0_22], %33 {strides = array<i32>} : memref<8x1xf32, #tpu.memory_space<vmem>>, vector<8x1xf32>,
    } else {
    }
    %c128_i32 = arith.constant 128 : i32
    %3 = arith.muli %arg1, %c128_i32 : i32
    %4 = tpu.assume_multiple %3, 128 : i32
    %c0 = arith.constant 0 : index
    %5 = arith.index_cast %4 : i32 to index
    %6 = vector.load %arg4[%c0, %5] : memref<1x128xf32, #tpu.memory_space<vmem>>, vector<1x128xf32>
    %c0_1 = arith.constant 0 : index
    %c0_2 = arith.constant 0 : index
    %7 = vector.load %arg2[%c0_1, %c0_2] : memref<8x32xbf16, #tpu.memory_space<vmem>>, vector<8x32xbf16>
    %c0_3 = arith.constant 0 : index
    %c0_4 = arith.constant 0 : index
    %8 = vector.load %arg3[%c0_3, %c0_4] : memref<32x128xbf16, #tpu.memory_space<vmem>>, vector<32x128xbf16>
    %cst = arith.constant dense<0.000000e+00> : vector<8x128xf32>
    %9 = tpu.matmul %7, %8, %cst {dimension_numbers = #tpu.dot_dimension_numbers<[1], [0], [0], [1], [0, 0, 1, 1], [], []>} : vector<8x32xbf16>, vector<32x128xbf16>, vector<8x128xf32> -> vector<8x128xf32>
    %10 = vector.broadcast %6 : vector<1x128xf32> to vector<8x128xf32>
    %11 = arith.addf %9, %10 : vector<8x128xf32>
    %c0_5 = arith.constant 0 : index
    %c0_6 = arith.constant 0 : index
    %12 = vector.load %arg6[%c0_5, %c0_6] : memref<8x1xf32, #tpu.memory_space<vmem>>, vector<8x1xf32>
    %cst_7 = arith.constant dense<0xFF800000> : vector<8xf32>
    %13 = vector.multi_reduction <maximumf>, %11, %cst_7 [1] : vector<8x128xf32> to vector<8xf32>
    %14 = vector.shape_cast %13 : vector<8xf32> to vector<8x1xf32>
    %15 = arith.maximumf %12, %14 : vector<8x1xf32>
    %c0_8 = arith.constant 0 : index
    %c0_9 = arith.constant 0 : index
    %16 = vector.load %arg7[%c0_8, %c0_9] : memref<8x1xf32, #tpu.memory_space<vmem>>, vector<8x1xf32>
    %17 = arith.subf %12, %15 : vector<8x1xf32>
    %18 = math.exp %17 : vector<8x1xf32>
    %19 = arith.mulf %16, %18 : vector<8x1xf32>
    %20 = vector.broadcast %15 : vector<8x1xf32> to vector<8x128xf32>
    %21 = arith.subf %11, %20 : vector<8x128xf32>
    %22 = math.exp %21 : vector<8x128xf32>
    %cst_10 = arith.constant dense<0.000000e+00> : vector<8xf32>
    %23 = vector.multi_reduction <add>, %22, %cst_10 [1] : vector<8x128xf32> to vector<8xf32>
    %24 = vector.shape_cast %23 : vector<8xf32> to vector<8x1xf32>
    %25 = arith.addf %19, %24 : vector<8x1xf32>
    %c0_11 = arith.constant 0 : index
    %c0_12 = arith.constant 0 : index
    %26 = vector.load %arg7[%c0_11, %c0_12] : memref<8x1xf32, #tpu.memory_space<vmem>>, vector<8x1xf32>
    tpu.vector_store %arg7[%c0_11, %c0_12], %25 {strides = array<i32>} : memref<8x1xf32, #tpu.memory_space<vmem>>, vector<8x1xf32>,
    %c0_13 = arith.constant 0 : index
    %c0_14 = arith.constant 0 : index
    %27 = vector.load %arg6[%c0_13, %c0_14] : memref<8x1xf32, #tpu.memory_space<vmem>>, vector<8x1xf32>
    tpu.vector_store %arg6[%c0_13, %c0_14], %15 {strides = array<i32>} : memref<8x1xf32, #tpu.memory_space<vmem>>, vector<8x1xf32>,
    %c0_i32_15 = arith.constant 0 : i32
    %28 = arith.cmpi eq, %arg1, %c0_i32_15 : i32
    %29 = arith.extui %28 : i1 to i32
    %c0_i32_16 = arith.constant 0 : i32
    %30 = arith.cmpi ne, %29, %c0_i32_16 : i32
    scf.if %30 {
      %c0_17 = arith.constant 0 : index
      %c0_18 = arith.constant 0 : index
      %31 = vector.load %arg6[%c0_17, %c0_18] : memref<8x1xf32, #tpu.memory_space<vmem>>, vector<8x1xf32>
      %c0_19 = arith.constant 0 : index
      %c0_20 = arith.constant 0 : index
      %32 = vector.load %arg7[%c0_19, %c0_20] : memref<8x1xf32, #tpu.memory_space<vmem>>, vector<8x1xf32>
      %33 = math.log %32 : vector<8x1xf32>
      %34 = arith.addf %31, %33 : vector<8x1xf32>
      %c0_21 = arith.constant 0 : index
      %c0_22 = arith.constant 0 : index
      %35 = vector.load %arg5[%c0_21, %c0_22] : memref<8x1xf32, #tpu.memory_space<vmem>>, vector<8x1xf32>
      tpu.vector_store %arg5[%c0_21, %c0_22], %34 {strides = array<i32>} : memref<8x1xf32, #tpu.memory_space<vmem>>, vector<8x1xf32>,
    } else {
    }
    return
  }
  func.func @transform_0(%arg0: i32, %arg1: i32) -> (i32, i32) {
    %c0_i32 = arith.constant 0 : i32
    %c0_i32_0 = arith.constant 0 : i32
    return %arg0, %c0_i32 : i32, i32
  }
  func.func @transform_1(%arg0: i32, %arg1: i32) -> (i32, i32) {
    %c0_i32 = arith.constant 0 : i32
    %c0_i32_0 = arith.constant 0 : i32
    return %c0_i32, %arg1 : i32, i32
  }
  func.func @transform_2(%arg0: i32, %arg1: i32) -> (i32, i32) {
    %c0_i32 = arith.constant 0 : i32
    %c0_i32_0 = arith.constant 0 : i32
    %c0_i32_1 = arith.constant 0 : i32
    return %c0_i32, %c0_i32_0 : i32, i32
  }
  func.func @transform_3(%arg0: i32, %arg1: i32) -> (i32, i32) {
    %c0_i32 = arith.constant 0 : i32
    %c0_i32_0 = arith.constant 0 : i32
    return %arg0, %c0_i32 : i32, i32
  }
}

</mosaic_0001>

<llo_original>
// kernel: tpu_custom_call.1
$region0: #{tpu_custom_call.1}
  #allocation0 [shape = 'u32[]', space=smem, size = 0x4, offset = 0x4, fixed_abs, tag = 'smem constant byte address 0x4 - core index']
  #allocation1 [shape = 'u32[144,128]{1,0:T(1,128)}', space=vmem, size = 0x12000, scoped, tag = 'internal scratch']
  #allocation2 [shape = 'f32[8,1]{1,0:T(8,128)}', space=vmem, size = 0x1000, scoped, tag = 'scratch operand']
  #allocation3 [shape = 'f32[8,1]{1,0:T(8,128)}', space=vmem, size = 0x1000, scoped, tag = 'scratch operand']
  %s0 = inlined_call_operand.hbm [shape: bf16[16,32], index: 0, kind: input, shape index: {}]
  %s1 = inlined_call_operand.hbm [shape: bf16[32,128], index: 1, kind: input, shape index: {}]
  %s2 = inlined_call_operand.vmem [shape: f32[1,128], index: 2, kind: input, shape index: {}]
  %s3 = inlined_call_operand.vmem [shape: f32[16,1], index: 3, kind: output, shape index: {}]
  %s4 = sld [smem:[#allocation0]]
  $region61: #{tpu_custom_call.1} parent=0
    _
  %s6 = ssub.s32 1, %s4
  %s7 = scalar_select 0, %s6, %s4
  $region1: #{tpu_custom_call.1} parent=0
    #allocation4 [shape = 'u8[4096]{0}', space=vmem, size = 0x1000, scoped, tag = 'input window, operand 0']
    #allocation5 [shape = 's32[2]{0}', space=sflag, size = 0x8, scoped, tag = 'scoped memory for tpu_custom_call.1']
    #allocation6 [shape = 'u8[8192]{0}', space=vmem, size = 0x2000, scoped, tag = 'input window, operand 1, single buffered']
    #allocation7 [shape = 's32[1]{0}', space=sflag, size = 0x4, scoped, tag = 'scoped memory for tpu_custom_call.1']
    %8 = vsyncpa [#allocation5], 0
    %s9 = scalar_lea.sflag [#allocation5], 1
    %10 = vsyncpa %s9, 0
    %11 = vsyncpa [#allocation7], 0
    loop: start=0, step=1, limit=4
    $region2: #{tpu_custom_call.1} parent=1 // loop_pre_header
      _
    $region3: #{tpu_custom_call.1} parent=1 // loop_header
      %s13 = sphi 0, %s17
      %p14 = scmp.ge.s32.totalorder %s13, 4
      %s20 = sphi 0, %s32
      %s21 = sphi 0, %s28
      %s22 = sphi 0, %s20
      %s23 = sphi 0, %s21
      %s24 = sphi 0, %s22
      %s25 = sphi 0, %s23
      %s35 = sphi 0, %s37
      %s38 = sphi 0, %s35
      %s39 = sphi 0, %s38
      %s55 = sphi 0, %s39
      %s61 = sphi 0, %s63
      %s64 = sphi 0, %s61
      %s65 = sphi 0, %s64
      %s81 = sphi 0, %s65
      %s85 = sphi 0, %s85
      %s87 = sphi 0, %s85
      %s88 = sphi 0, %s87
      %s102 = sphi 0, %s88
      %s108 = sphi 0, %s110
      %s111 = sphi 0, %s108
      %s112 = sphi 0, %s111
      %s128 = sphi 0, %s112
    $region4: #{tpu_custom_call.1} parent=1 // loop_header_branch
      %16 = sbr.rel (%p14) target = $region8
    $region5: #{tpu_custom_call.1} parent=1 // loop_body
      %s18 = ssub.s32 %s13, 1
      %s19 = ssub.s32 %s13, 2
      %s26 = sadd.s32 1, %s21
      %p27 = scmp.ge.s32.totalorder %s26, 1
      %s28 = scalar_select %p27, 0, %s26
      %s29 = sadd.s32 1, %s20
      %s30 = scalar_select %p27, %s29, %s20
      %p31 = scmp.ge.s32.totalorder %s30, 2
      %s32 = scalar_select %p31, 0, %s30
      %s33 = ssub.s32 %s20, %s32
      %p34 = scmp.eq.s32.totalorder %s33, 0
      %s36 = sadd.s32 %s35, 1
      %s37 = scalar_select %p34, %s35, %s36
      %p40 = pneg %p34
      %p41 = scmp.eq.s32.totalorder %s13, 1
      %p42 = por %p40, %p41
      %p43 = scmp.ne.s32.totalorder %s35, %s38
      %p44 = scmp.eq.s32.totalorder %s13, 0
      %p45 = por %p43, %p44
      %p46 = scmp.ne.s32.totalorder %s35, %s38
      %p47 = scmp.eq.s32.totalorder %s18, 1
      %p48 = por %p46, %p47
      %p49 = scmp.ne.s32.totalorder %s38, %s39
      %p50 = scmp.eq.s32.totalorder %s18, 0
      %p51 = por %p49, %p50
      %p52 = scmp.ne.s32.totalorder %s38, %s39
      %p53 = scmp.eq.s32.totalorder %s19, 1
      %p54 = por %p52, %p53
      %p56 = scmp.ne.s32.totalorder %s39, %s55
      %p57 = scmp.eq.s32.totalorder %s19, 0
      %p58 = por %p56, %p57
      %s59 = ssub.s32 %s21, %s28
      %p60 = scmp.eq.s32.totalorder %s59, 0
      %s62 = sadd.s32 %s61, 1
      %s63 = scalar_select %p60, %s61, %s62
      %p66 = pneg %p60
      %p67 = scmp.eq.s32.totalorder %s13, 1
      %p68 = por %p66, %p67
      %p69 = scmp.ne.s32.totalorder %s61, %s64
      %p70 = scmp.eq.s32.totalorder %s13, 0
      %p71 = por %p69, %p70
      %p72 = scmp.ne.s32.totalorder %s61, %s64
      %p73 = scmp.eq.s32.totalorder %s18, 1
      %p74 = por %p72, %p73
      %p75 = scmp.ne.s32.totalorder %s64, %s65
      %p76 = scmp.eq.s32.totalorder %s18, 0
      %p77 = por %p75, %p76
      %p78 = scmp.ne.s32.totalorder %s64, %s65
      %p79 = scmp.eq.s32.totalorder %s19, 1
      %p80 = por %p78, %p79
      %p82 = scmp.ne.s32.totalorder %s65, %s81
      %p83 = scmp.eq.s32.totalorder %s19, 0
      %p84 = por %p82, %p83
      %s86 = sadd.s32 %s85, 1
      %p89 = scmp.eq.s32.totalorder %s13, 1
      %p90 = scmp.ne.s32.totalorder %s85, %s87
      %p91 = scmp.eq.s32.totalorder %s13, 0
      %p92 = por %p90, %p91
      %p93 = scmp.ne.s32.totalorder %s85, %s87
      %p94 = scmp.eq.s32.totalorder %s18, 1
      %p95 = por %p93, %p94
      %p96 = scmp.ne.s32.totalorder %s87, %s88
      %p97 = scmp.eq.s32.totalorder %s18, 0
      %p98 = por %p96, %p97
      %p99 = scmp.ne.s32.totalorder %s87, %s88
      %p100 = scmp.eq.s32.totalorder %s19, 1
      %p101 = por %p99, %p100
      %p103 = scmp.ne.s32.totalorder %s88, %s102
      %p104 = scmp.eq.s32.totalorder %s19, 0
      %p105 = por %p103, %p104
      %s106 = ssub.s32 %s20, %s32
      %p107 = scmp.eq.s32.totalorder %s106, 0
      %s109 = sadd.s32 %s108, 1
      %s110 = scalar_select %p107, %s108, %s109
      %p113 = pneg %p107
      %p114 = scmp.eq.s32.totalorder %s13, 1
      %p115 = por %p113, %p114
      %p116 = scmp.ne.s32.totalorder %s108, %s111
      %p117 = scmp.eq.s32.totalorder %s13, 0
      %p118 = por %p116, %p117
      %p119 = scmp.ne.s32.totalorder %s108, %s111
      %p120 = scmp.eq.s32.totalorder %s18, 1
      %p121 = por %p119, %p120
      %p122 = scmp.ne.s32.totalorder %s111, %s112
      %p123 = scmp.eq.s32.totalorder %s18, 0
      %p124 = por %p122, %p123
      %p125 = scmp.ne.s32.totalorder %s111, %s112
      %p126 = scmp.eq.s32.totalorder %s19, 1
      %p127 = por %p125, %p126
      %p129 = scmp.ne.s32.totalorder %s112, %s128
      %p130 = scmp.eq.s32.totalorder %s19, 0
      %p131 = por %p129, %p130
      %p132 = scmp.le.s32.totalorder 1, %s13
      %p133 = scmp.lt.s32.totalorder %s13, 3
      %p134 = pnand %p132, %p133
      %p135 = pneg %p134
      // Predicated region
      $region9: #{tpu_custom_call.1} parent=5 // pred_check
        _
      $region10: #{tpu_custom_call.1} parent=5 // pred_check_branch
        %137 = sbr.rel (%p134) target = $region12
      $region11: #{tpu_custom_call.1} parent=5 // pred_region
        %s138 = ssub.s32 %s13, 1
        // Predicated region
        $region13: #{tpu_custom_call.1} parent=11 // pred_check
          %p139 = pneg %p77
        $region14: #{tpu_custom_call.1} parent=11 // pred_check_branch
          %141 = sbr.rel (%p139) target = $region16
        $region15: #{tpu_custom_call.1} parent=11 // pred_region
          %s143 = ssub.s32 256, 256
          %144 = vsyncadd [#allocation7], %s143
          %s145 = smul.addr %s23, 64
          %s146 = scalar_lea.hbm %s1, %s145
          %s147 = sshll.u32 [#allocation6], 4
          %s148 = int_to_ptr.vmem [resolvable:$true] %s147
          %153 = dma.hbm_to_vmem [thread:$0]  %s146, 256, %s148, [#allocation7], 64, 64, 4
        $region16: #{tpu_custom_call.1} parent=11 // pred_fallthru
          _
        // Predicated region
        $region17: #{tpu_custom_call.1} parent=11 // pred_check
          %p154 = pneg %p98
        $region18: #{tpu_custom_call.1} parent=11 // pred_check_branch
          %156 = sbr.rel (%p154) target = $region20
        $region19: #{tpu_custom_call.1} parent=11 // pred_region
          _
        $region20: #{tpu_custom_call.1} parent=11 // pred_fallthru
          _
      $region12: #{tpu_custom_call.1} parent=5 // pred_fallthru
        _
      %p157 = scmp.lt.s32.totalorder %s13, 2
      // Predicated region
      $region21: #{tpu_custom_call.1} parent=5 // pred_check
        %p158 = pneg %p157
      $region22: #{tpu_custom_call.1} parent=5 // pred_check_branch
        %160 = sbr.rel (%p158) target = $region24
      $region23: #{tpu_custom_call.1} parent=5 // pred_region
        // Predicated region
        $region25: #{tpu_custom_call.1} parent=23 // pred_check
          %p161 = pneg %p45
        $region26: #{tpu_custom_call.1} parent=23 // pred_check_branch
          %163 = sbr.rel (%p161) target = $region28
        $region27: #{tpu_custom_call.1} parent=23 // pred_region
          %s164 = sand.u32 %s35, 1
          %s165 = scalar_lea.sflag [#allocation5], %s164
          %s166 = sand.u32 %s35, 1
          %s167 = smul.addr %s166, 4
          %s168 = scalar_lea.vmem [#allocation4], %s167
          %s170 = ssub.s32 64, 64
          %171 = vsyncadd %s165, %s170
          %s172 = smul.addr %s20, 64
          %s173 = scalar_lea.hbm %s0, %s172
          %s175 = sshll.u32 %s168, 4
          %s176 = int_to_ptr.vmem [resolvable:$true] %s175
          %178 = dma.hbm_to_vmem [thread:$0]  %s173, 64, %s176, %s165
        $region28: #{tpu_custom_call.1} parent=23 // pred_fallthru
          _
      $region24: #{tpu_custom_call.1} parent=5 // pred_fallthru
        _
      %p179 = scmp.le.s32.totalorder 1, %s13
      %p180 = scmp.lt.s32.totalorder %s13, 3
      %p181 = pnand %p179, %p180
      %p182 = pneg %p181
      // Predicated region
      $region29: #{tpu_custom_call.1} parent=5 // pred_check
        _
      $region30: #{tpu_custom_call.1} parent=5 // pred_check_branch
        %184 = sbr.rel (%p181) target = $region32
      $region31: #{tpu_custom_call.1} parent=5 // pred_region
        %s185 = ssub.s32 %s13, 1
        %s186 = sand.u32 %s38, 1
        %s187 = scalar_lea.sflag [#allocation5], %s186
        %s188 = sand.u32 %s38, 1
        %s189 = smul.addr %s188, 4
        %s190 = scalar_lea.vmem [#allocation4], %s189
        // Predicated region
        $region33: #{tpu_custom_call.1} parent=31 // pred_check
          %p191 = pneg %p51
        $region34: #{tpu_custom_call.1} parent=31 // pred_check_branch
          %193 = sbr.rel (%p191) target = $region36
        $region35: #{tpu_custom_call.1} parent=31 // pred_region
          %194 = dma.done %s187, 64
        $region36: #{tpu_custom_call.1} parent=31 // pred_fallthru
          _
        // Predicated region
        $region37: #{tpu_custom_call.1} parent=31 // pred_check
          %p195 = pneg %p77
        $region38: #{tpu_custom_call.1} parent=31 // pred_check_branch
          %197 = sbr.rel (%p195) target = $region40
        $region39: #{tpu_custom_call.1} parent=31 // pred_region
          %198 = dma.done [#allocation7], 256
        $region40: #{tpu_custom_call.1} parent=31 // pred_fallthru
          _
        %s199 = sand.u32 %s38, 1
        %s200 = scalar_lea.sflag [#allocation5], %s199
        %s201 = sand.u32 %s38, 1
        %s202 = smul.addr %s201, 4
        %s203 = scalar_lea.vmem [#allocation4], %s202
        %p204 = pneg %p51
        %p205 = pneg %p48
        %p206 = pneg %p77
        %p207 = pneg %p74
        %p208 = pneg %p98
        %p209 = pneg %p95
        %p210 = pneg %p124
        %p211 = pneg %p121
        %p212 = scmp.lt.s32.totalorder %s22, 1
        %s213 = scalar_select %p212, %s22, 1
        %s214 = smul.addr %s213, 8
        %s215 = scalar_lea.vmem %s3, %s214
        %p216 = scmp.lt.s32.totalorder %s22, 1
        %s217 = scalar_select %p216, %s22, 1
        %s218 = smul.addr %s217, 8
        %s219 = scalar_lea.vmem %s3, %s218
        %p221 = scmp.eq.s32.totalorder %s23, 0
        // Predicated region
        $region41: #{tpu_custom_call.1} parent=31 // pred_check
          %p222 = pneg %p221
        $region42: #{tpu_custom_call.1} parent=31 // pred_check_branch
          %224 = sbr.rel (%p222) target = $region44
        $region43: #{tpu_custom_call.1} parent=31 // pred_region
          %vm225 = vcmask 7168
          %226 = vst.msk [vmem:[#allocation2] sm:$0xff] %vm225, -inf
          %227 = vst.msk [vmem:[#allocation3] sm:$0xff] %vm225, 0.0
        $region44: #{tpu_custom_call.1} parent=31 // pred_fallthru
          _
        %s228 = smul.u32 %s23, 128
        %s229 = sshra.s32 %s228, 7
        %s230 = sand.u32 %s228, 127
        %s231 = scalar_lea.vmem %s2, %s229
        %v232 = vld [vmem:[%s231] sm:$0x1]
        %v233 = vld [vmem:[%s190] sm:$0xf]
        %v234 = vld [vmem:[#allocation6] sm:$0xf]
        %v235 = vld [vmem:[#allocation6 + $0x4] sm:$0xf]
        %v236 = vld [vmem:[#allocation6 + $0x8] sm:$0xf]
        %v237 = vld [vmem:[#allocation6 + $0xc] sm:$0xf]
        %v239 = vlaneseq
        %v240 = vshrl.u32 %v239, 7
        %v241 = vsub.s32 0, %v240
        %v242 = vrot.slane %v232, %v241
        %v248 = vunpack.c.l.b16 %v234
        %v249 = vunpack.c.l.b16 %v235
        %v250 = vunpack.c.l.b16 %v236
        %v251 = vunpack.c.l.b16 %v237
        %v252 = vpack.c.b16 %v249, %v248
        %v253 = vpack.c.b16 %v251, %v250
        %vm256 = vcmask 261120
        %v258 = vsel %vm256, %v233, 0
        %260 = vmatprep.subr.bf16.mxu0 0
        %261 = vmatpush1.bf16.msra.mxu0 %v252
        %262 = vmatprep.subr.bf16.mxu0 0
        %263 = vmatpush1.bf16.msra.mxu0 %v253
        %264 = vmatprep.subr.bf16.mxu0 0
        %265 = vmatpush1.bf16.msra.mxu0 0
        %266 = vmatprep.subr.bf16.mxu0 0
        %267 = vmatpush1.bf16.msra.mxu0 0
        %268 = vmatprep.subr.bf16.mxu0 0
        %269 = vmatpush1.bf16.msra.mxu0 0
        %270 = vmatprep.subr.bf16.mxu0 0
        %271 = vmatpush1.bf16.msra.mxu0 0
        %272 = vmatprep.subr.bf16.mxu0 0
        %273 = vmatpush1.bf16.msra.mxu0 0
        %274 = vmatprep.subr.bf16.mxu0 0
        %275 = vmatpush1.bf16.msra.mxu0 0
        %276 = vmatprep.subr.bf16.mxu0 0
        %277 = vmatpush1.bf16.msra.mxu0 0
        %278 = vmatprep.subr.bf16.mxu0 0
        %279 = vmatpush1.bf16.msra.mxu0 0
        %280 = vmatprep.subr.bf16.mxu0 0
        %281 = vmatpush1.bf16.msra.mxu0 0
        %282 = vmatprep.subr.bf16.mxu0 0
        %283 = vmatpush1.bf16.msra.mxu0 0
        %284 = vmatprep.subr.bf16.mxu0 0
        %285 = vmatpush1.bf16.msra.mxu0 0
        %286 = vmatprep.subr.bf16.mxu0 0
        %287 = vmatpush1.bf16.msra.mxu0 0
        %288 = vmatprep.subr.bf16.mxu0 0
        %289 = vmatpush1.bf16.msra.mxu0 0
        %290 = vmatprep.subr.bf16.mxu0 0
        %291 = vmatpush1.bf16.msra.mxu0 0
        %292 = vmatprep.mubr.bf16.mxu0 0
        %293 = vmatmul.mubr.bf16.gmra.mrb[0].mxu0 %v258
        %v294 = vpop.f32.mrb[0].mxu0
        %v295 = vadd.f32 %v242, %v294
        %v296 = vpop.f32.mrb[0].mxu0
        %v297 = vpop.f32.mrb[0].mxu0
        %v298 = vpop.f32.mrb[0].mxu0
        %299 = vdwg.mxu0
        %v300 = vld [vmem:[#allocation2] sm:$0xff]
        %301 = vmax.xlane.f32.xlu0 %v295
        %v302 = vpop.xlane.xlu0 %301
        %v303 = vmax.f32 %v300, %v302
        %v304 = vld [vmem:[#allocation3] sm:$0xff]
        %v305 = vsub.f32 %v300, %v303
        %v306 = vmul.f32 %v305, 1.442695
        %v307 = vpow.pop %v306
        %v308 = vmul.f32 %v304, %v307
        %310 = vset.pattern.permute.xlu0 0
        %311 = vperm.xlu0 %310, %v303
        %v312 = vpop.permute.xlu0 %311
        %v314 = vsub.f32 %v295, %v312
        %v315 = vmul.f32 %v314, 1.442695
        %v316 = vpow.pop %v315
        %317 = vadd.xlane.f32.xlu0 %v316
        %v318 = vpop.xlane.xlu0 %317
        %v319 = vadd.f32 %v308, %v318
        %vm320 = vcmask 7168
        %321 = vst.msk [vmem:[#allocation3] sm:$0xff] %vm320, %v319
        %322 = vst.msk [vmem:[#allocation2] sm:$0xff] %vm320, %v303
        // Predicated region
        $region45: #{tpu_custom_call.1} parent=31 // pred_check
          %p323 = pneg %p221
        $region46: #{tpu_custom_call.1} parent=31 // pred_check_branch
          %325 = sbr.rel (%p323) target = $region48
        $region47: #{tpu_custom_call.1} parent=31 // pred_region
          %v326 = vld [vmem:[#allocation2] sm:$0xff]
          %v327 = vld [vmem:[#allocation3] sm:$0xff]
          %v328 = vlog2.pop %v327
          %v329 = vmul.f32 %v328, 0.6931472
          %v330 = vadd.f32 %v326, %v329
          %331 = vst.msk [vmem:[%s219] sm:$0xff] %vm320, %v330
        $region48: #{tpu_custom_call.1} parent=31 // pred_fallthru
          _
        %p332 = scmp.lt.s32.totalorder %s22, 1
        %s333 = scalar_select %p332, %s22, 1
        %s334 = smul.addr %s333, 8
        %s335 = scalar_lea.vmem %s3, %s334
        // Predicated region
        $region49: #{tpu_custom_call.1} parent=31 // pred_check
          %p336 = pneg %p121
        $region50: #{tpu_custom_call.1} parent=31 // pred_check_branch
          %338 = sbr.rel (%p336) target = $region52
        $region51: #{tpu_custom_call.1} parent=31 // pred_region
          _
        $region52: #{tpu_custom_call.1} parent=31 // pred_fallthru
          _
      $region32: #{tpu_custom_call.1} parent=5 // pred_fallthru
        _
      %p339 = scmp.le.s32.totalorder 2, %s13
      // Predicated region
      $region53: #{tpu_custom_call.1} parent=5 // pred_check
        %p340 = pneg %p339
      $region54: #{tpu_custom_call.1} parent=5 // pred_check_branch
        %342 = sbr.rel (%p340) target = $region56
      $region55: #{tpu_custom_call.1} parent=5 // pred_region
        %s343 = ssub.s32 %s13, 2
        // Predicated region
        $region57: #{tpu_custom_call.1} parent=55 // pred_check
          %p344 = pneg %p127
        $region58: #{tpu_custom_call.1} parent=55 // pred_check_branch
          %346 = sbr.rel (%p344) target = $region60
        $region59: #{tpu_custom_call.1} parent=55 // pred_region
          %p347 = scmp.lt.s32.totalorder %s24, 1
          %s348 = scalar_select %p347, %s24, 1
          %s349 = smul.addr %s348, 8
          %s350 = scalar_lea.vmem %s3, %s349
        $region60: #{tpu_custom_call.1} parent=55 // pred_fallthru
          _
      $region56: #{tpu_custom_call.1} parent=5 // pred_fallthru
        _
    $region6: #{tpu_custom_call.1} parent=1 // loop_footer
      %s17 = sadd.s32 1, %s13
    $region7: #{tpu_custom_call.1} parent=1 // loop_footer_branch
      %12 = sbr.rel target = $region3
    $region8: #{tpu_custom_call.1} parent=1 // loop_exit
      _
    %351 = vsyncpa [#allocation5], 1
    %s352 = scalar_lea.sflag [#allocation5], 1
    %353 = vsyncpa %s352, 1
    %354 = vsyncpa [#allocation7], 1

</llo_original>
